<compile_context>
chip_gen: v7x
topology: tpu7x:2x2x1
jax: 0.10.0
libtpu: 0.0.40
codegen_flags: <defaults>
</compile_context>

<pallas_src>
import functools

import jax
import jax.numpy as jnp
import numpy as np
from jax import lax
from jax.experimental import pallas as pl
from jax.experimental.pallas import tpu as pltpu

_LANE = 128
_MAX_TILE_B = 256                       # batch rows per tile (multiple of 32)
_MAX_TILE_S = 32768                     # bounds the lane-chunk unroll / compile time
_VMEM_TILE_BUDGET = 48 * 1024 * 1024    # streamed blocks (x2 buffers) + f32 temporaries
_F32_TEMP_BYTES_PER_ELEM = 24           # allowance for ~6 f32 full-tile intermediates


def _round_up(x, m):
    return ((x + m - 1) // m) * m


def _sublane_align(itemsize):
    # Sublane multiple required by the block's second-to-last dim for packed dtypes.
    return {4: 8, 2: 16, 1: 32}.get(int(itemsize), 8)


def _choose_tiles(B, S, itemsizes):
    align_b = max(_sublane_align(i) for i in itemsizes)
    if B > _MAX_TILE_B:
        tile_b = _MAX_TILE_B
    elif B >= 2 * align_b:
        # Guarantee >=2 blocks along the "parallel" B axis (v7x has 2 TensorCores/chip).
        tile_b = _round_up((B + 1) // 2, align_b)
        if tile_b >= B:
            tile_b = B
    else:
        tile_b = B                       # full dim -> always layout-legal
    sum_bytes = sum(int(i) for i in itemsizes)
    per_elem = 2 * sum_bytes + _F32_TEMP_BYTES_PER_ELEM
    cap_s = (_VMEM_TILE_BUDGET // (tile_b * per_elem)) // _LANE * _LANE
    cap_s = max(_LANE, min(cap_s, _MAX_TILE_S))
    tile_s = S if S <= cap_s else cap_s
    return tile_b, tile_s


def _vmem_limit_bytes(tile_b, tile_s, sum_bytes):
    est = tile_b * tile_s * (2 * sum_bytes + _F32_TEMP_BYTES_PER_ELEM) + (2 << 20)
    return int(min(max(est, 32 << 20), 56 << 20))   # <= 56 MiB: safe on v7x's 64 MiB VMEM


def _chunk_sum(x, acc_w):
    """Reduce (tile_b, tile_s) -> (tile_b, acc_w) f32.

    acc_w == 128: lane-aligned VPU adds over whole-vreg 128-lane chunks (tree-shaped,
    no XLU cross-lane reduce, no relayout).  acc_w == 1: plain jnp.sum fallback for
    tiles narrower than a vreg.
    """
    if acc_w == 1:
        return jnp.sum(x, axis=-1, keepdims=True)
    ts = x.shape[-1]
    chunks = [x[:, c * acc_w:(c + 1) * acc_w] for c in range(ts // acc_w)]
    while len(chunks) > 1:
        nxt = [chunks[i] + chunks[i + 1] for i in range(0, len(chunks) - 1, 2)]
        if len(chunks) % 2:
            nxt.append(chunks[-1])
        chunks = nxt
    return chunks[0]


def _kl_rowsum_kernel(pi_ref, ref_ref, kl_acc_ref, *, seq_len, tile_s, acc_w):
    """Unmasked: accumulate per-row (lane-chunked) KL partial sums."""
    s = pl.program_id(1)

    @pl.when(s == 0)
    def _init():
        kl_acc_ref[...] = jnp.zeros_like(kl_acc_ref)

    def step(apply_tail):
        def body():
            pi = pi_ref[...].astype(jnp.float32)
            ref = ref_ref[...].astype(jnp.float32)
            delta = ref - pi
            if apply_tail:
                rem = seq_len % tile_s
                col = lax.broadcasted_iota(jnp.int32, delta.shape, 1)
                # Padded lanes: kl = exp(0) - 0 - 1 = 0 exactly (NaN-safe).
                delta = jnp.where(col < rem, delta, 0.0)
            kl = jnp.exp(delta) - delta - 1.0
            kl_acc_ref[...] += _chunk_sum(kl, acc_w)
        return body

    if seq_len % tile_s == 0:
        step(False)()
    else:
        last = pl.num_programs(1) - 1
        pl.when(s != last)(step(False))   # interior tiles: no tail iota/where
        pl.when(s == last)(step(True))


def _kl_rowsum_masked_kernel(pi_ref, ref_ref, mask_ref, kl_acc_ref, m_acc_ref,
                             *, seq_len, tile_s, acc_w):
    """Masked: accumulate per-row sums of kl*mask and mask (lane-chunked)."""
    s = pl.program_id(1)

    @pl.when(s == 0)
    def _init():
        kl_acc_ref[...] = jnp.zeros_like(kl_acc_ref)
        m_acc_ref[...] = jnp.zeros_like(m_acc_ref)

    def step(apply_tail):
        def body():
            pi = pi_ref[...].astype(jnp.float32)
            ref = ref_ref[...].astype(jnp.float32)
            m = mask_ref[...].astype(jnp.float32)   # int8/bf16/f32 mask -> f32 on VPU
            delta = ref - pi
            if apply_tail:
                rem = seq_len % tile_s
                col = lax.broadcasted_iota(jnp.int32, delta.shape, 1)
                valid = col < rem
                delta = jnp.where(valid, delta, 0.0)   # padded kl -> 0 (no inf*0)
                m = jnp.where(valid, m, 0.0)           # padded (garbage) mask -> 0
            kl = jnp.exp(delta) - delta - 1.0
            kl_acc_ref[...] += _chunk_sum(kl * m, acc_w)
            m_acc_ref[...] += _chunk_sum(m, acc_w)
        return body

    if seq_len % tile_s == 0:
        step(False)()
    else:
        last = pl.num_programs(1) - 1
        pl.when(s != last)(step(False))
        pl.when(s == last)(step(True))


def grpo_simple_loss(pi_old_logprobs, pi_logprobs, ref_logprobs, advantages,
                     padding_masks=None, epsilon=0.1, kl_coeff=0.1,
                     *, tile_b=None, tile_s=None):
    """Forward pass of GRPOSimpleLoss.

    Returns (loss, policy_loss, kl_loss, ratios, clipfrac); as in the PyTorch module,
    ratios/clipfrac are the constants 1.0 / 0.0.  pi_old_logprobs and epsilon are
    accepted for API parity but unused (matching upstream).
    """
    del pi_old_logprobs, epsilon  # unused by GRPOSimpleLoss.forward
    B, S = pi_logprobs.shape
    adv = advantages.astype(jnp.float32).reshape(B)

    # Stream the mask narrow: bool/int -> int8 (1 B/token); floats stay native.
    mask = None
    if padding_masks is not None:
        if jnp.issubdtype(padding_masks.dtype, jnp.floating):
            mask = padding_masks
        elif jnp.dtype(padding_masks.dtype).itemsize == 1:
            mask = padding_masks.astype(jnp.int8)
        else:
            mask = padding_masks.astype(jnp.int8)

    itemsizes = [jnp.dtype(pi_logprobs.dtype).itemsize,
                 jnp.dtype(ref_logprobs.dtype).itemsize]
    if mask is not None:
        itemsizes.append(jnp.dtype(mask.dtype).itemsize)

    tb_def, ts_def = _choose_tiles(B, S, itemsizes)
    tile_b = tb_def if tile_b is None else tile_b
    tile_s = ts_def if tile_s is None else tile_s

    # User-forced tile_b that is incompatible with 1-byte mask tiling -> widen mask.
    if (mask is not None and jnp.dtype(mask.dtype).itemsize == 1
            and tile_b != B and tile_b % 32 != 0):
        mask = mask.astype(jnp.float32)

    sum_bytes = (jnp.dtype(pi_logprobs.dtype).itemsize
                 + jnp.dtype(ref_logprobs.dtype).itemsize
                 + (jnp.dtype(mask.dtype).itemsize if mask is not None else 0))

    acc_w = _LANE if (tile_s % _LANE == 0 and tile_s >= _LANE) else 1

    grid = (pl.cdiv(B, tile_b), pl.cdiv(S, tile_s))
    lp_spec = pl.BlockSpec((tile_b, tile_s), lambda b, s: (b, s))
    acc_spec = pl.BlockSpec((tile_b, acc_w), lambda b, s: (b, 0))
    acc_shape = jax.ShapeDtypeStruct((B, acc_w), jnp.float32)
    cparams = pltpu.CompilerParams(
        dimension_semantics=("parallel", "arbitrary"),
        vmem_limit_bytes=_vmem_limit_bytes(tile_b, tile_s, sum_bytes))

    if mask is None:
        kernel = functools.partial(_kl_rowsum_kernel,
                                   seq_len=S, tile_s=tile_s, acc_w=acc_w)
        kl_acc = pl.pallas_call(
            kernel,
            grid=grid,
            in_specs=[lp_spec, lp_spec],
            out_specs=acc_spec,
            out_shape=acc_shape,
            compiler_params=cparams,
        )(pi_logprobs, ref_logprobs)
        kl_sum = jnp.sum(kl_acc, axis=-1)
        row_kl = kl_sum / jnp.float32(S)
        kl_loss = jnp.mean(row_kl)
        policy_loss = jnp.mean(adv)                       # exp(pi - pi.detach()) == 1
        loss = jnp.mean(-(adv - kl_coeff * row_kl))
    else:
        kernel = functools.partial(_kl_rowsum_masked_kernel,
                                   seq_len=S, tile_s=tile_s, acc_w=acc_w)
        kl_acc, m_acc = pl.pallas_call(
            kernel,
            grid=grid,
            in_specs=[lp_spec, lp_spec, lp_spec],
            out_specs=(acc_spec, acc_spec),
            out_shape=(acc_shape, acc_shape),
            compiler_params=cparams,
        )(pi_logprobs, ref_logprobs, mask)
        kl_sum = jnp.sum(kl_acc, axis=-1)
        m_sum = jnp.sum(m_acc, axis=-1)
        row_kl = kl_sum / m_sum
        kl_loss = jnp.mean(row_kl)
        policy_loss = jnp.mean(adv * m_sum / m_sum)       # == mean(adv); keeps 0/0->NaN parity
        loss = jnp.mean(-(adv * m_sum - kl_coeff * kl_sum) / m_sum)

    # TODO(synk): forward-only; a custom_vjp with a matching streaming backward kernel
    # would be needed for training-time gradients w.r.t. pi_logprobs.
    ratios = jnp.asarray(1.0, jnp.float32)
    clipfrac = jnp.asarray(0.0, jnp.float32)
    return loss, policy_loss, kl_loss, ratios, clipfrac


def _reference(pi_old, pi, ref, adv, mask=None, epsilon=0.1, kl_coeff=0.1):
    """Plain-JAX mirror of GRPOSimpleLoss.forward (f32 math), for verification."""
    del pi_old, epsilon
    pi = pi.astype(jnp.float32)
    ref = ref.astype(jnp.float32)
    adv = adv.astype(jnp.float32)
    delta = ref - pi
    per_token_kl = jnp.exp(delta) - delta - 1.0
    per_token_policy_loss = jnp.exp(pi - lax.stop_gradient(pi)) * adv[:, None]
    per_token_loss = -(per_token_policy_loss - kl_coeff * per_token_kl)

    def masked_mean_dim1(x, m):
        if m is None:
            return x.mean(axis=1)
        mf = m.astype(jnp.float32)
        return (x * mf).sum(axis=1) / mf.sum(axis=1)

    loss = masked_mean_dim1(per_token_loss, mask).mean()
    policy_loss = masked_mean_dim1(per_token_policy_loss, mask).mean()
    kl_loss = masked_mean_dim1(per_token_kl, mask).mean()
    return loss, policy_loss, kl_loss, jnp.asarray(1.0, jnp.float32), jnp.asarray(0.0, jnp.float32)


def _check(got, want, rtol=1e-5, atol=1e-5):
    for g, w in zip(got, want):
        np.testing.assert_allclose(np.asarray(g), np.asarray(w), rtol=rtol, atol=atol)


if __name__ == "__main__":
    key = jax.random.PRNGKey(0)
    ks = jax.random.split(key, 16)

    # Case 1: f32 logprobs, no padding mask.  B = batch*groups = 8, seq = 16.
    B, S = 8, 16
    pi_old = -jax.random.uniform(ks[0], (B, S), jnp.float32, 0.0, 0.2)
    pi = pi_old + 0.05 * jax.random.normal(ks[1], (B, S), jnp.float32)
    ref = pi_old + 0.05 * jax.random.normal(ks[2], (B, S), jnp.float32)
    adv = jax.random.normal(ks[3], (B,), jnp.float32)

    got1 = jax.block_until_ready(grpo_simple_loss(pi_old, pi, ref, adv, None))
    _check(got1, _reference(pi_old, pi, ref, adv, None))

    # Case 2: f32 logprobs with bool padding mask (streamed as int8 in the kernel).
    mask = jax.random.bernoulli(ks[4], 0.7, (B, S))
    mask = mask.at[:, 0].set(True)   # every row keeps at least one token
    got2 = jax.block_until_ready(grpo_simple_loss(pi_old, pi, ref, adv, mask))
    _check(got2, _reference(pi_old, pi, ref, adv, mask))

    # Case 3: bf16 logprobs streamed natively, cast to f32 inside the kernel.
    got3 = jax.block_until_ready(grpo_simple_loss(
        pi_old.astype(jnp.bfloat16), pi.astype(jnp.bfloat16),
        ref.astype(jnp.bfloat16), adv, mask))
    want3 = _reference(pi_old.astype(jnp.bfloat16), pi.astype(jnp.bfloat16),
                       ref.astype(jnp.bfloat16), adv, mask)
    _check(got3, want3, rtol=1e-4, atol=1e-5)

    # Case 4: forced small tiles to exercise the (parallel B) x (arbitrary S) grid,
    # accumulator init/accumulate, ragged-S-tail masking and the f32-mask fallback
    # (tile_b=8 is not int8-tileable for B=16).
    B4, S4 = 16, 320   # S4 % 128 != 0 -> ragged tail; 2 B-tiles x 3 S-tiles.
    pi_old4 = -jax.random.uniform(ks[5], (B4, S4), jnp.float32, 0.0, 0.2)
    pi4 = pi_old4 + 0.05 * jax.random.normal(ks[6], (B4, S4), jnp.float32)
    ref4 = pi_old4 + 0.05 * jax.random.normal(ks[7], (B4, S4), jnp.float32)
    adv4 = jax.random.normal(ks[8], (B4,), jnp.float32)
    mask4 = jax.random.bernoulli(ks[9], 0.7, (B4, S4)).at[:, 0].set(True)

    got4 = jax.block_until_ready(grpo_simple_loss(
        pi_old4, pi4, ref4, adv4, mask4, tile_b=8, tile_s=128))
    _check(got4, _reference(pi_old4, pi4, ref4, adv4, mask4))

    got5 = jax.block_until_ready(grpo_simple_loss(
        pi_old4, pi4, ref4, adv4, None, tile_b=8, tile_s=128))
    _check(got5, _reference(pi_old4, pi4, ref4, adv4, None))

    # Case 6: default tiles at B=64 -> batch axis split into 2 "parallel" tiles
    # (v7x megacore path), int8 mask streamed natively, lane-dense (tile_b,128) acc.
    B6, S6 = 64, 640   # 640 % 128 == 0 -> no ragged tail
    pi_old6 = -jax.random.uniform(ks[10], (B6, S6), jnp.float32, 0.0, 0.2)
    pi6 = pi_old6 + 0.05 * jax.random.normal(ks[11], (B6, S6), jnp.float32)
    ref6 = pi_old6 + 0.05 * jax.random.normal(ks[12], (B6, S6), jnp.float32)
    adv6 = jax.random.normal(ks[13], (B6,), jnp.float32)
    mask6 = jax.random.bernoulli(ks[14], 0.7, (B6, S6)).at[:, 0].set(True)

    got6 = jax.block_until_ready(grpo_simple_loss(pi_old6, pi6, ref6, adv6, mask6))
    _check(got6, _reference(pi_old6, pi6, ref6, adv6, mask6))

    got6b = jax.block_until_ready(grpo_simple_loss(pi_old6, pi6, ref6, adv6, None))
    _check(got6b, _reference(pi_old6, pi6, ref6, adv6, None))

    # Case 7: ragged S with lane-dense accumulator + int8 mask + explicit 32-row tiles.
    S7 = 704   # 704 = 2*256 + 192 -> ragged tail on last S tile
    pi_old7 = -jax.random.uniform(ks[15], (B6, S7), jnp.float32, 0.0, 0.2)
    pi7 = pi_old7 + 0.05 * jax.random.normal(ks[11], (B6, S7), jnp.float32)
    ref7 = pi_old7 + 0.05 * jax.random.normal(ks[12], (B6, S7), jnp.float32)
    mask7 = jax.random.bernoulli(ks[14], 0.7, (B6, S7)).at[:, 0].set(True)

    got7 = jax.block_until_ready(grpo_simple_loss(
        pi_old7, pi7, ref7, adv6, mask7, tile_b=32, tile_s=256))
    _check(got7, _reference(pi_old7, pi7, ref7, adv6, mask7))

    print("KERNEL_OK")
</pallas_src>

<mosaic_0001>
module attributes {stable_mosaic.version = 11 : i64} {
  func.func @_kl_rowsum_kernel(%arg0: i32, %arg1: i32, %arg2: memref<8x16xf32, #tpu.memory_space<vmem>>, %arg3: memref<8x16xf32, #tpu.memory_space<vmem>>, %arg4: memref<8x1xf32, #tpu.memory_space<vmem>>) attributes {dimension_semantics = [#tpu.dimension_semantics<parallel>, #tpu.dimension_semantics<arbitrary>], iteration_bounds = array<i64: 1, 1>, scalar_prefetch = 0 : i64, scratch_operands = 0 : i64, tpu.core_type = #tpu.core_type<tc>, window_params = [{transform_indices = @transform_0, window_bounds = array<i64: 8, 16>}, {transform_indices = @transform_1, window_bounds = array<i64: 8, 16>}, {transform_indices = @transform_2, window_bounds = array<i64: 8, 1>}]} {
    %c0_i32 = arith.constant 0 : i32
    %0 = arith.cmpi eq, %arg1, %c0_i32 : i32
    %1 = arith.extui %0 : i1 to i32
    %c0_i32_0 = arith.constant 0 : i32
    %2 = arith.cmpi ne, %1, %c0_i32_0 : i32
    scf.if %2 {
      %cst_9 = arith.constant 0.000000e+00 : f32
      %15 = vector.broadcast %cst_9 : f32 to vector<8x1xf32>
      %c0_10 = arith.constant 0 : index
      %c0_11 = arith.constant 0 : index
      %16 = vector.load %arg4[%c0_10, %c0_11] : memref<8x1xf32, #tpu.memory_space<vmem>>, vector<8x1xf32>
      tpu.vector_store %arg4[%c0_10, %c0_11], %15 {strides = array<i32>} : memref<8x1xf32, #tpu.memory_space<vmem>>, vector<8x1xf32>,
    } else {
    }
    %c0 = arith.constant 0 : index
    %c0_1 = arith.constant 0 : index
    %3 = vector.load %arg2[%c0, %c0_1] : memref<8x16xf32, #tpu.memory_space<vmem>>, vector<8x16xf32>
    %c0_2 = arith.constant 0 : index
    %c0_3 = arith.constant 0 : index
    %4 = vector.load %arg3[%c0_2, %c0_3] : memref<8x16xf32, #tpu.memory_space<vmem>>, vector<8x16xf32>
    %5 = arith.subf %4, %3 : vector<8x16xf32>
    %6 = math.exp %5 : vector<8x16xf32>
    %7 = arith.subf %6, %5 : vector<8x16xf32>
    %cst = arith.constant 1.000000e+00 : f32
    %8 = vector.broadcast %cst : f32 to vector<8x16xf32>
    %9 = arith.subf %7, %8 : vector<8x16xf32>
    %c0_4 = arith.constant 0 : index
    %c0_5 = arith.constant 0 : index
    %10 = vector.load %arg4[%c0_4, %c0_5] : memref<8x1xf32, #tpu.memory_space<vmem>>, vector<8x1xf32>
    %cst_6 = arith.constant dense<0.000000e+00> : vector<8xf32>
    %11 = vector.multi_reduction <add>, %9, %cst_6 [1] : vector<8x16xf32> to vector<8xf32>
    %12 = vector.shape_cast %11 : vector<8xf32> to vector<8x1xf32>
    %13 = arith.addf %10, %12 : vector<8x1xf32>
    %c0_7 = arith.constant 0 : index
    %c0_8 = arith.constant 0 : index
    %14 = vector.load %arg4[%c0_7, %c0_8] : memref<8x1xf32, #tpu.memory_space<vmem>>, vector<8x1xf32>
    tpu.vector_store %arg4[%c0_7, %c0_8], %13 {strides = array<i32>} : memref<8x1xf32, #tpu.memory_space<vmem>>, vector<8x1xf32>,
    return
  }
  func.func @transform_0(%arg0: i32, %arg1: i32) -> (i32, i32) {
    %c0_i32 = arith.constant 0 : i32
    return %arg0, %arg1 : i32, i32
  }
  func.func @transform_1(%arg0: i32, %arg1: i32) -> (i32, i32) {
    %c0_i32 = arith.constant 0 : i32
    return %arg0, %arg1 : i32, i32
  }
  func.func @transform_2(%arg0: i32, %arg1: i32) -> (i32, i32) {
    %c0_i32 = arith.constant 0 : i32
    %c0_i32_0 = arith.constant 0 : i32
    return %arg0, %c0_i32 : i32, i32
  }
}

</mosaic_0001>

<llo_original>
// kernel: tpu_custom_call.1
$region0: #{tpu_custom_call.1}
  #allocation0 [shape = 'u32[]', space=smem, size = 0x4, offset = 0x4, fixed_abs, tag = 'smem constant byte address 0x4 - core index']
  #allocation1 [shape = 'u32[144,128]{1,0:T(1,128)}', space=vmem, size = 0x12000, scoped, tag = 'internal scratch']
  %s0 = inlined_call_operand.hbm [shape: f32[8,16], index: 0, kind: input, shape index: {}]
  %s1 = inlined_call_operand.hbm [shape: f32[8,16], index: 1, kind: input, shape index: {}]
  %s2 = inlined_call_operand.vmem [shape: f32[8,1], index: 2, kind: output, shape index: {}]
  %s3 = sld [smem:[#allocation0]]
  $region30: #{tpu_custom_call.1} parent=0
    _
  %s5 = ssub.s32 1, %s3
  %s6 = scalar_select 0, %s5, %s3
  $region1: #{tpu_custom_call.1} parent=0
    #allocation2 [shape = 'u8[4096]{0}', space=vmem, size = 0x1000, scoped, tag = 'input window, operand 0, single buffered']
    #allocation3 [shape = 's32[1]{0}', space=sflag, size = 0x4, scoped, tag = 'scoped memory for tpu_custom_call.1']
    #allocation4 [shape = 'u8[4096]{0}', space=vmem, size = 0x1000, scoped, tag = 'input window, operand 1, single buffered']
    #allocation5 [shape = 's32[1]{0}', space=sflag, size = 0x4, scoped, tag = 'scoped memory for tpu_custom_call.1']
    %7 = vsyncpa [#allocation3], 0
    %8 = vsyncpa [#allocation5], 0
    // Predicated region
    $region2: #{tpu_custom_call.1} parent=1 // pred_check
      _
    $region3: #{tpu_custom_call.1} parent=1 // pred_check_branch
      %10 = sbr.rel (0) target = $region5
    $region4: #{tpu_custom_call.1} parent=1 // pred_region
      %s12 = ssub.s32 128, 128
      %13 = vsyncadd [#allocation3], %s12
      %s15 = sshll.u32 [#allocation2], 4
      %s16 = int_to_ptr.vmem [resolvable:$true] %s15
      %18 = dma.hbm_to_vmem [thread:$0]  %s0, 128, %s16, [#allocation3]
    $region5: #{tpu_custom_call.1} parent=1 // pred_fallthru
      _
    // Predicated region
    $region6: #{tpu_custom_call.1} parent=1 // pred_check
      _
    $region7: #{tpu_custom_call.1} parent=1 // pred_check_branch
      %20 = sbr.rel (0) target = $region9
    $region8: #{tpu_custom_call.1} parent=1 // pred_region
      %s22 = ssub.s32 128, 128
      %23 = vsyncadd [#allocation5], %s22
      %s25 = sshll.u32 [#allocation4], 4
      %s26 = int_to_ptr.vmem [resolvable:$true] %s25
      %28 = dma.hbm_to_vmem [thread:$0]  %s1, 128, %s26, [#allocation5]
    $region9: #{tpu_custom_call.1} parent=1 // pred_fallthru
      _
    // Predicated region
    $region10: #{tpu_custom_call.1} parent=1 // pred_check
      _
    $region11: #{tpu_custom_call.1} parent=1 // pred_check_branch
      %30 = sbr.rel (0) target = $region13
    $region12: #{tpu_custom_call.1} parent=1 // pred_region
      %31 = dma.done [#allocation3], 128
    $region13: #{tpu_custom_call.1} parent=1 // pred_fallthru
      _
    // Predicated region
    $region14: #{tpu_custom_call.1} parent=1 // pred_check
      _
    $region15: #{tpu_custom_call.1} parent=1 // pred_check_branch
      %33 = sbr.rel (0) target = $region17
    $region16: #{tpu_custom_call.1} parent=1 // pred_region
      %34 = dma.done [#allocation5], 128
    $region17: #{tpu_custom_call.1} parent=1 // pred_fallthru
      _
    %p35 = scmp.eq.s32.totalorder 0, 0
    // Predicated region
    $region18: #{tpu_custom_call.1} parent=1 // pred_check
      %p36 = pneg %p35
    $region19: #{tpu_custom_call.1} parent=1 // pred_check_branch
      %38 = sbr.rel (%p36) target = $region21
    $region20: #{tpu_custom_call.1} parent=1 // pred_region
      %vm39 = vcmask 7168
      %40 = vst.msk [vmem:[%s2] sm:$0xff] %vm39, 0.0
    $region21: #{tpu_custom_call.1} parent=1 // pred_fallthru
      _
    %v41 = vld [vmem:[#allocation2] sm:$0xff]
    %v42 = vld [vmem:[#allocation4] sm:$0xff]
    %v43 = vsub.f32 %v42, %v41
    %v44 = vmul.f32 %v43, 1.442695
    %v45 = vpow.pop %v44
    %v46 = vsub.f32 %v45, %v43
    %v47 = vsub.f32 %v46, 1.0
    %v48 = vld [vmem:[%s2] sm:$0xff]
    %vm49 = vcmask 130048
    %v50 = vsel %vm49, %v47, 0.0
    %51 = vadd.xlane.f32.xlu0 %v50
    %v52 = vpop.xlane.xlu0 %51
    %v53 = vadd.f32 %v48, %v52
    %vm54 = vcmask 7168
    %55 = vst.msk [vmem:[%s2] sm:$0xff] %vm54, %v53
    // Predicated region
    $region22: #{tpu_custom_call.1} parent=1 // pred_check
      _
    $region23: #{tpu_custom_call.1} parent=1 // pred_check_branch
      %57 = sbr.rel (0) target = $region25
    $region24: #{tpu_custom_call.1} parent=1 // pred_region
      _
    $region25: #{tpu_custom_call.1} parent=1 // pred_fallthru
      _
    // Predicated region
    $region26: #{tpu_custom_call.1} parent=1 // pred_check
      _
    $region27: #{tpu_custom_call.1} parent=1 // pred_check_branch
      %59 = sbr.rel (0) target = $region29
    $region28: #{tpu_custom_call.1} parent=1 // pred_region
      _
    $region29: #{tpu_custom_call.1} parent=1 // pred_fallthru
      _
    %60 = vsyncpa [#allocation3], 1
    %61 = vsyncpa [#allocation5], 1

</llo_original>
